<compile_context>
chip_gen: v7x
topology: tpu7x:2x2x1
jax: 0.10.0
libtpu: 0.0.40
codegen_flags: <defaults>
</compile_context>

<pallas_src>
import functools

import jax
import jax.numpy as jnp
from jax.experimental import pallas as pl
from jax.experimental.pallas import tpu as pltpu


def _ls_ce_kernel(x_ref, tgt_ref, out_ref, *, smoothing, n_total):
    i = pl.program_id(0)

    x = x_ref[...].astype(jnp.float32)                 # (TN, C) f32 compute
    tn, c = x.shape

    # Stable row-wise log-sum-exp pieces.
    m = jnp.max(x, axis=-1, keepdims=True)                            # (TN, 1)
    lse = jnp.log(jnp.sum(jnp.exp(x - m), axis=-1, keepdims=True))    # (TN, 1)

    # Fused gather + mean term:
    #   (1-s)*x_t + s*mean(x) = sum_c w_c * x_c,
    #   w_c = (1-s) + s/C  if c == target[row]  else  s/C
    base = smoothing / c
    col_ids = jax.lax.broadcasted_iota(jnp.int32, (tn, c), 1)         # (TN, C)
    w = jnp.where(col_ids == tgt_ref[...], (1.0 - smoothing) + base, base)
    wx = jnp.sum(w * x, axis=-1, keepdims=True)                       # (TN, 1)

    loss = (m + lse) - wx                                             # (TN, 1)

    # Mask rows of the (possibly partial) last tile; emit one partial sum
    # per grid block (reduced to the final mean in the JAX wrapper).
    row_ids = i * tn + jax.lax.broadcasted_iota(jnp.int32, (tn, 1), 0)
    valid = row_ids < n_total
    out_ref[0, 0] = jnp.sum(jnp.where(valid, loss, 0.0))


def _vmem_limit_bytes():
    """Generation-aware scoped-VMEM limit (v7x: ~48 MiB of 64; v5e/v6e: 96 of 128)."""
    cap = 64 << 20  # conservative fallback = v7x per-TC capacity
    try:
        info = pltpu.get_tpu_info()
        cap = int(getattr(info, "vmem_capacity_bytes", cap))
    except Exception:
        pass
    return int(min((cap * 3) // 4, 96 << 20))


def _pick_block_rows(n, c, itemsize, vmem_limit_bytes, max_rows=8192):
    """Largest sublane-aligned row tile that fits the per-generation budget.

    Per-row footprint = double-buffered native-dtype logits tile (2 * C * item)
    plus ~3 live f32 (TN, C) temporaries inside the kernel (cast / exp /
    weighted-sum).  Half the scoped limit is reserved as headroom for the
    target blocks, output and compiler scratch.
    """
    per_row = 2 * c * itemsize + 3 * c * 4
    budget = vmem_limit_bytes // 2
    rows = budget // max(1, per_row)
    rows = int(min(rows, max_rows, n))
    if rows >= n:
        return n                                      # full-extent row block
    return max(8, (rows // 8) * 8)


def label_smoothing_cross_entropy(x, target, smoothing=0.1, block_rows=None):
    """x: (N, C) logits (any float dtype); target: (N,) int labels. Scalar f32."""
    n, c = x.shape
    tgt = target.reshape(n, 1).astype(jnp.int32)

    vmem_limit = _vmem_limit_bytes()
    tn = block_rows if block_rows is not None else _pick_block_rows(
        n, c, jnp.dtype(x.dtype).itemsize, vmem_limit)
    num_blocks = pl.cdiv(n, tn)

    kernel = functools.partial(
        _ls_ce_kernel, smoothing=float(smoothing), n_total=n)

    partials = pl.pallas_call(
        kernel,
        out_shape=jax.ShapeDtypeStruct((num_blocks, 1), jnp.float32),
        grid_spec=pltpu.PrefetchScalarGridSpec(
            num_scalar_prefetch=0,
            grid=(num_blocks,),
            in_specs=[
                pl.BlockSpec((tn, c), lambda i: (i, 0)),   # logits tile (VMEM)
                pl.BlockSpec((tn, 1), lambda i: (i, 0)),   # targets tile (VMEM)
            ],
            out_specs=pl.BlockSpec(
                (1, 1), lambda i: (i, 0),                  # per-block partial
                memory_space=pltpu.MemorySpace.SMEM),
        ),
        compiler_params=pltpu.CompilerParams(
            # Independent per-block partials -> row axis can megacore-shard.
            dimension_semantics=("parallel",),
            vmem_limit_bytes=vmem_limit,
        ),
    )(x, tgt)

    # Tiny final reduction over per-block partials in plain JAX.
    return jnp.sum(partials) * (1.0 / n)


def _reference(x, target, smoothing=0.1):
    log_probs = jax.nn.log_softmax(x.astype(jnp.float32), axis=-1)
    nll = -jnp.take_along_axis(log_probs, target[:, None], axis=-1)[:, 0]
    smooth = -jnp.mean(log_probs, axis=-1)
    return jnp.mean((1.0 - smoothing) * nll + smoothing * smooth)


if __name__ == "__main__":
    key = jax.random.PRNGKey(0)
    kx, kt, kx2, kt2 = jax.random.split(key, 4)

    # Case 1: small f32, single full-extent row block.
    N, C = 8, 32
    x = jax.random.normal(kx, (N, C), dtype=jnp.float32)
    target = jax.random.randint(kt, (N,), 0, C, dtype=jnp.int32)
    loss = jax.block_until_ready(label_smoothing_cross_entropy(x, target, 0.1))
    ref = _reference(x, target, 0.1)
    assert jnp.allclose(loss, ref, atol=2e-5, rtol=2e-5), (loss, ref)

    # Case 2: exercises the row grid, partial-tile masking, and the
    # parallel per-block partial-sum path (40 rows, TN=16 -> 3 blocks).
    N2, C2 = 40, 32
    x2 = jax.random.normal(kx2, (N2, C2), dtype=jnp.bfloat16)  # bf16 over HBM
    target2 = jax.random.randint(kt2, (N2,), 0, C2, dtype=jnp.int32)
    loss2 = jax.block_until_ready(
        label_smoothing_cross_entropy(x2, target2, 0.1, block_rows=16))
    ref2 = _reference(x2, target2, 0.1)
    assert jnp.allclose(loss2, ref2, atol=2e-5, rtol=2e-5), (loss2, ref2)

    print("KERNEL_OK")
</pallas_src>

<mosaic_0001>
module attributes {stable_mosaic.version = 11 : i64} {
  func.func @_ls_ce_kernel(%arg0: i32, %arg1: memref<8x32xf32, #tpu.memory_space<vmem>>, %arg2: memref<8x1xi32, #tpu.memory_space<vmem>>, %arg3: memref<1x1xf32, #tpu.memory_space<smem>>) attributes {dimension_semantics = [#tpu.dimension_semantics<parallel>], iteration_bounds = array<i64: 1>, scalar_prefetch = 0 : i64, scratch_operands = 0 : i64, tpu.core_type = #tpu.core_type<tc>, window_params = [{transform_indices = @transform_0, window_bounds = array<i64: 8, 32>}, {transform_indices = @transform_1, window_bounds = array<i64: 8, 1>}, {transform_indices = @transform_2, window_bounds = array<i64: 1, 1>}]} {
    %c0 = arith.constant 0 : index
    %c0_0 = arith.constant 0 : index
    %0 = vector.load %arg1[%c0, %c0_0] : memref<8x32xf32, #tpu.memory_space<vmem>>, vector<8x32xf32>
    %cst = arith.constant dense<0xFF800000> : vector<8xf32>
    %1 = vector.multi_reduction <maximumf>, %0, %cst [1] : vector<8x32xf32> to vector<8xf32>
    %2 = vector.shape_cast %1 : vector<8xf32> to vector<8x1xf32>
    %3 = vector.broadcast %2 : vector<8x1xf32> to vector<8x32xf32>
    %4 = arith.subf %0, %3 : vector<8x32xf32>
    %5 = math.exp %4 : vector<8x32xf32>
    %cst_1 = arith.constant dense<0.000000e+00> : vector<8xf32>
    %6 = vector.multi_reduction <add>, %5, %cst_1 [1] : vector<8x32xf32> to vector<8xf32>
    %7 = vector.shape_cast %6 : vector<8xf32> to vector<8x1xf32>
    %8 = math.log %7 : vector<8x1xf32>
    %9 = tpu.iota {dimensions = array<i32: 1>} : vector<8x32xi32>
    %c0_2 = arith.constant 0 : index
    %c0_3 = arith.constant 0 : index
    %10 = vector.load %arg2[%c0_2, %c0_3] : memref<8x1xi32, #tpu.memory_space<vmem>>, vector<8x1xi32>
    %11 = vector.broadcast %10 : vector<8x1xi32> to vector<8x32xi32>
    %12 = arith.cmpi eq, %9, %11 : vector<8x32xi32>
    %cst_4 = arith.constant 0.903124988 : f32
    %cst_5 = arith.constant 3.125000e-03 : f32
    %13 = vector.broadcast %cst_4 : f32 to vector<8x32xf32>
    %14 = vector.broadcast %cst_5 : f32 to vector<8x32xf32>
    %15 = arith.select %12, %13, %14 : vector<8x32xi1>, vector<8x32xf32>
    %16 = arith.mulf %15, %0 : vector<8x32xf32>
    %cst_6 = arith.constant dense<0.000000e+00> : vector<8xf32>
    %17 = vector.multi_reduction <add>, %16, %cst_6 [1] : vector<8x32xf32> to vector<8xf32>
    %18 = vector.shape_cast %17 : vector<8xf32> to vector<8x1xf32>
    %19 = arith.addf %2, %8 : vector<8x1xf32>
    %20 = arith.subf %19, %18 : vector<8x1xf32>
    %c8_i32 = arith.constant 8 : i32
    %21 = arith.muli %arg0, %c8_i32 : i32
    %22 = tpu.iota {dimensions = array<i32: 0>} : vector<8x1xi32>
    %23 = vector.broadcast %21 : i32 to vector<8x1xi32>
    %24 = arith.addi %23, %22 : vector<8x1xi32>
    %c8_i32_7 = arith.constant 8 : i32
    %25 = vector.broadcast %c8_i32_7 : i32 to vector<8x1xi32>
    %26 = arith.cmpi slt, %24, %25 : vector<8x1xi32>
    %cst_8 = arith.constant 0.000000e+00 : f32
    %27 = vector.broadcast %cst_8 : f32 to vector<8x1xf32>
    %28 = arith.select %26, %20, %27 : vector<8x1xi1>, vector<8x1xf32>
    %29 = vector.shape_cast %28 : vector<8x1xf32> to vector<1x8x1xf32>
    %cst_9 = arith.constant dense<0.000000e+00> : vector<1xf32>
    %30 = vector.multi_reduction <add>, %29, %cst_9 [1, 2] : vector<1x8x1xf32> to vector<1xf32>
    %31 = vector.shape_cast %30 : vector<1xf32> to vector<1x1x1xf32>
    %32 = vector.extract %31[0, 0, 0] : f32 from vector<1x1x1xf32>
    %c0_10 = arith.constant 0 : index
    %c0_11 = arith.constant 0 : index
    %33 = memref.load %arg3[%c0_10, %c0_11] : memref<1x1xf32, #tpu.memory_space<smem>>
    memref.store %32, %arg3[%c0_10, %c0_11] : memref<1x1xf32, #tpu.memory_space<smem>>
    return
  }
  func.func @transform_0(%arg0: i32) -> (i32, i32) {
    %c0_i32 = arith.constant 0 : i32
    %c0_i32_0 = arith.constant 0 : i32
    return %arg0, %c0_i32 : i32, i32
  }
  func.func @transform_1(%arg0: i32) -> (i32, i32) {
    %c0_i32 = arith.constant 0 : i32
    %c0_i32_0 = arith.constant 0 : i32
    return %arg0, %c0_i32 : i32, i32
  }
  func.func @transform_2(%arg0: i32) -> (i32, i32) {
    %c0_i32 = arith.constant 0 : i32
    %c0_i32_0 = arith.constant 0 : i32
    return %arg0, %c0_i32 : i32, i32
  }
}

</mosaic_0001>

<llo_original>
// kernel: tpu_custom_call.1
$region0: #{tpu_custom_call.1}
  #allocation0 [shape = 'u32[]', space=smem, size = 0x4, offset = 0x4, fixed_abs, tag = 'smem constant byte address 0x4 - core index']
  #allocation1 [shape = 'u32[144,128]{1,0:T(1,128)}', space=vmem, size = 0x12000, scoped, tag = 'internal scratch']
  %s0 = inlined_call_operand.vmem [shape: f32[8,32], index: 0, kind: input, shape index: {}]
  %s1 = inlined_call_operand.vmem [shape: s32[8,1], index: 1, kind: input, shape index: {}]
  %s2 = inlined_call_operand.hbm [shape: f32[1,1], index: 2, kind: output, shape index: {}]
  %s3 = sld [smem:[#allocation0]]
  $region18: #{tpu_custom_call.1} parent=0
    _
  %s5 = ssub.s32 1, %s3
  %s6 = scalar_select 0, %s5, %s3
  $region1: #{tpu_custom_call.1} parent=0
    #allocation2 [shape = 'u8[512]{0}', space=smem, size = 0x200, scoped, tag = 'output window, operand 0, single buffered']
    #allocation3 [shape = 's32[1]{0}', space=sflag, size = 0x4, scoped, tag = 'scoped memory for tpu_custom_call.1']
    %7 = vsyncpa [#allocation3], 0
    // Predicated region
    $region2: #{tpu_custom_call.1} parent=1 // pred_check
      _
    $region3: #{tpu_custom_call.1} parent=1 // pred_check_branch
      %9 = sbr.rel (0) target = $region5
    $region4: #{tpu_custom_call.1} parent=1 // pred_region
      _
    $region5: #{tpu_custom_call.1} parent=1 // pred_fallthru
      _
    // Predicated region
    $region6: #{tpu_custom_call.1} parent=1 // pred_check
      _
    $region7: #{tpu_custom_call.1} parent=1 // pred_check_branch
      %11 = sbr.rel (0) target = $region9
    $region8: #{tpu_custom_call.1} parent=1 // pred_region
      _
    $region9: #{tpu_custom_call.1} parent=1 // pred_fallthru
      _
    %v12 = vld [vmem:[%s0] sm:$0xff]
    %vm13 = vcmask 261120
    %v14 = vsel %vm13, %v12, -inf
    %15 = vmax.xlane.f32.xlu0 %v14
    %v16 = vpop.xlane.xlu0 %15
    %v17 = vsub.f32 %v12, %v16
    %v18 = vmul.f32 %v17, 1.442695
    %v19 = vpow.pop %v18
    %v20 = vsel %vm13, %v19, 0.0
    %21 = vadd.xlane.f32.xlu0 %v20
    %v22 = vpop.xlane.xlu0 %21
    %v23 = vlog2.pop %v22
    %v24 = vmul.f32 %v23, 0.6931472
    %v25 = vlaneseq
    %v26 = vand.u32 %v25, 127
    %v27 = vld [vmem:[%s1] sm:$0xff]
    %28 = vset.pattern.permute.xlu0 0
    %29 = vperm.xlu0 %28, %v27
    %v30 = vpop.permute.xlu0 %29
    %vm31 = vcmp.eq.s32.totalorder %v26, %v30
    %v32 = vsel %vm31, 0.903125, 0.003125
    %v33 = vmul.f32 %v32, %v12
    %v34 = vsel %vm13, %v33, 0.0
    %35 = vadd.xlane.f32.xlu0 %v34
    %v36 = vpop.xlane.xlu0 %35
    %v37 = vadd.f32 %v16, %v24
    %v38 = vsub.f32 %v37, %v36
    %s39 = smul.u32 0, 8
    %v40 = vlaneseq
    %v41 = vshrl.u32 %v40, 7
    %v42 = vstv %s39
    %v43 = vadd.s32 %v42, %v41
    %vm44 = vcmp.lt.s32.totalorder %v43, 8
    %v45 = vsel %vm44, %v38, 0.0
    %vm46 = vcmask 7168
    %v47 = vsel %vm46, %v45, 0.0
    %48 = vadd.xlane.f32.xlu0 %v47
    %v49 = vpop.xlane.xlu0 %48
    %v50 = vrot.slane %v49, 4
    %v51 = vadd.f32 %v49, %v50
    %v52 = vrot.slane %v51, 2
    %v53 = vadd.f32 %v51, %v52
    %v54 = vrot.slane %v53, 1
    %v55 = vadd.f32 %v53, %v54
    %s56 = vtos %v55
    %s57 = scalar_lea.smem [#allocation2], 0
    %58 = sst [smem:[%s57]] %s56
    // Predicated region
    $region10: #{tpu_custom_call.1} parent=1 // pred_check
      _
    $region11: #{tpu_custom_call.1} parent=1 // pred_check_branch
      %60 = sbr.rel (0) target = $region13
    $region12: #{tpu_custom_call.1} parent=1 // pred_region
      %s62 = ssub.s32 16, 16
      %63 = vsyncadd [#allocation3], %s62
      %66 = dma.smem_to_hbm [#allocation2], 16, %s2, [#allocation3]
    $region13: #{tpu_custom_call.1} parent=1 // pred_fallthru
      _
    // Predicated region
    $region14: #{tpu_custom_call.1} parent=1 // pred_check
      _
    $region15: #{tpu_custom_call.1} parent=1 // pred_check_branch
      %68 = sbr.rel (0) target = $region17
    $region16: #{tpu_custom_call.1} parent=1 // pred_region
      %69 = dma.done [#allocation3], 16
    $region17: #{tpu_custom_call.1} parent=1 // pred_fallthru
      _
    %70 = sfence
    %71 = vsyncpa [#allocation3], 1

</llo_original>
